<compile_context>
chip_gen: v6e
topology: v6e:2x2x1
jax: 0.10.0
libtpu: 0.0.40
codegen_flags: <defaults>
</compile_context>

<pallas_src>
import numpy as np
import jax
import jax.numpy as jnp
from jax.experimental import pallas as pl
from jax.experimental.pallas import tpu as pltpu


# ---------------------------------------------------------------------------
# Parameter setup (deterministic, float64, mirrors gaussian_kernel_nd)
# ---------------------------------------------------------------------------
def _as_pair(v):
    return tuple(v) if isinstance(v, (list, tuple)) else (v, v)


def _cdiv(a, b):
    return -(-a // b)


def _gaussian_taps_1d(k, std):
    xs = np.arange(k, dtype=np.float64) - (k - 1) / 2.0
    g = np.exp(xs ** 2 / (-2.0 * float(std) ** 2))
    return g / g.sum()


def gaussian_kernel_2d(kernel_size, std):
    """2D normalized Gaussian; equals gaussian_kernel_nd(kernel_size, std, 2)."""
    (kh, kw), (sy, sx) = _as_pair(kernel_size), _as_pair(std)
    return np.outer(_gaussian_taps_1d(kh, sy), _gaussian_taps_1d(kw, sx))


# ---------------------------------------------------------------------------
# Pallas kernel: batched, H-tiled, valid separable Gaussian blur
# ---------------------------------------------------------------------------
def _make_blur_kernel(C, KH, KW, T, WO, wy, wx, do_carry):
    wy = [float(w) for w in wy]   # compile-time constants, no SMEM loads
    wx = [float(w) for w in wx]
    halo = KH - 1

    def kernel(x_ref, o_ref, xs_scr, v_scr):
        # x_ref : (B, C, T, W)      input tile (VMEM)
        # o_ref : (B, T, WO)        output tile; row r holds output row
        #                           (tile_base + r - halo); rows fed by the halo
        #                           head are garbage and sliced off outside.
        # xs_scr: (B, T + halo, W)  f32 channel-sum staging; rows [0, halo) carry
        #                           the previous H-tile's tail across grid steps.
        # v_scr : (B, T, W)         f32 vertically-filtered staging.
        if do_carry and halo > 0:
            # Carry the previous H-tile's last `halo` channel-sum rows to the head.
            xs_scr[:, pl.ds(0, halo), :] = xs_scr[:, pl.ds(T, halo), :]

        # Channel sum in f32 (every output channel sees the same Gaussian applied
        # to the sum over input channels).
        xv = x_ref[...]
        cs = xv[:, 0].astype(jnp.float32)
        for c in range(1, C):
            cs = cs + xv[:, c].astype(jnp.float32)
        xs_scr[:, pl.ds(halo, T), :] = cs

        # Vertical pass: KH shifted-row windows read back from VMEM scratch
        # (no cross-sublane value-slice shuffles); constant taps.
        v = wy[0] * xs_scr[:, pl.ds(0, T), :]
        for ky in range(1, KH):
            v = v + wy[ky] * xs_scr[:, pl.ds(ky, T), :]
        v_scr[...] = v

        # Horizontal pass: KW shifted-column windows, plain VPU FMAs
        # (dense band matmul removed -> no quadratic VMEM / MXU work).
        out = wx[0] * v_scr[:, :, pl.ds(0, WO)]
        for kx in range(1, KW):
            out = out + wx[kx] * v_scr[:, :, pl.ds(kx, WO)]
        o_ref[...] = out.astype(o_ref.dtype)

    return kernel


def gaussian_blur2d(x, kernel_size=5, std=1.5, pad_mode="none", pad_value=0):
    # layout: NCHW
    if pad_mode != "none":
        # TODO(synk): conv2dsame (reflect/replicate/constant padding) not implemented.
        raise NotImplementedError("only pad_mode='none' is implemented")
    (KH, KW), (sy, sx) = _as_pair(kernel_size), _as_pair(std)
    N, C, H, W = x.shape
    HO, WO = H - KH + 1, W - KW + 1
    halo = KH - 1
    wy = _gaussian_taps_1d(KH, sy)
    wx = _gaussian_taps_1d(KW, sx)

    itemsize = x.dtype.itemsize
    # Per image-row VMEM: double-buffered input/output blocks + f32 staging/temps.
    row_bytes = 2 * C * W * itemsize + 2 * WO * itemsize + 6 * W * 4
    budget = 24 << 20   # working-set target, comfortably under every gen's VMEM

    # H tiling: whole image if it fits, else 8-aligned row tiles whose (KH-1)-row
    # halo is carried in scratch (bounds VMEM independent of H, adds pipeline steps).
    max_rows = max(8, budget // max(row_bytes, 1))
    if H <= max_rows:
        T = H
    else:
        T = int(max(8, min(512, (max_rows // 8) * 8)))
    nh = _cdiv(H, T)

    # Batch tiling: several images per grid step (fills the pipeline and amortizes
    # the fixed per-step overhead for small images).
    tile_bytes = T * row_bytes + halo * W * 4
    B_TILE = int(max(1, min(N, budget // max(tile_bytes, 1), 32)))
    nb = _cdiv(N, B_TILE)

    # Generation-aware scoped-VMEM limit (v7x: 64 MiB physical -> cap at 40 MiB;
    # v5e/v6e: 128 MiB -> 64 MiB is safe).
    try:
        vmem_cap = int(pltpu.get_tpu_info().vmem_capacity_bytes)
    except Exception:
        vmem_cap = 64 << 20
    vmem_limit = (40 << 20) if vmem_cap <= (64 << 20) else (64 << 20)

    blurred = pl.pallas_call(
        _make_blur_kernel(C, KH, KW, T, WO, wy, wx, do_carry=nh > 1),
        out_shape=jax.ShapeDtypeStruct((N, nh * T, WO), x.dtype),
        grid=(nb, nh),
        in_specs=[pl.BlockSpec((B_TILE, C, T, W), lambda b, h: (b, 0, h, 0))],
        out_specs=pl.BlockSpec((B_TILE, T, WO), lambda b, h: (b, h, 0)),
        scratch_shapes=[
            pltpu.VMEM((B_TILE, T + halo, W), jnp.float32),
            pltpu.VMEM((B_TILE, T, W), jnp.float32),
        ],
        compiler_params=pltpu.CompilerParams(
            dimension_semantics=("parallel", "arbitrary"),
            vmem_limit_bytes=vmem_limit,
        ),
    )(x)

    # Buffer rows are shifted down by `halo` (halo/pad rows hold garbage and are
    # dropped).  All C output channels are identical -> write once, broadcast here.
    # TODO(synk): consumers that can work with the single-channel (N, HO, WO) slab
    # should use `blurred[:, halo:halo + HO, :]` directly and skip the C-fold
    # broadcast to avoid the extra N*C*HO*WO HBM traffic.
    return jnp.broadcast_to(blurred[:, None, halo:halo + HO, :], (N, C, HO, WO))


# ---------------------------------------------------------------------------
# Main
# ---------------------------------------------------------------------------
if __name__ == "__main__":
    key = jax.random.PRNGKey(0)
    x = jax.random.normal(key, (2, 4, 16, 16), dtype=jnp.float32)

    out = gaussian_blur2d(x, kernel_size=5, std=1.5, pad_mode="none")
    out = jax.block_until_ready(out)

    # Pure-JAX reference: conv2d with weight expanded to (C, C, kh, kw)
    kern = jnp.asarray(gaussian_kernel_2d(5, 1.5), dtype=jnp.float32)
    C = x.shape[1]
    w_full = jnp.broadcast_to(kern[None, None, :, :], (C, C) + kern.shape)
    ref = jax.lax.conv_general_dilated(
        x, w_full, window_strides=(1, 1), padding="VALID",
        dimension_numbers=("NCHW", "OIHW", "NCHW"),
    )

    assert out.shape == ref.shape, (out.shape, ref.shape)
    assert jnp.allclose(out, ref, rtol=1e-5, atol=1e-5), float(jnp.max(jnp.abs(out - ref)))
    print("KERNEL_OK")
</pallas_src>

<mosaic_0001>
module attributes {stable_mosaic.version = 11 : i64} {
  func.func @kernel(%arg0: i32, %arg1: i32, %arg2: memref<2x4x16x16xf32, #tpu.memory_space<vmem>>, %arg3: memref<2x16x12xf32, #tpu.memory_space<vmem>>, %arg4: memref<2x20x16xf32, #tpu.memory_space<vmem>>, %arg5: memref<2x16x16xf32, #tpu.memory_space<vmem>>) attributes {dimension_semantics = [#tpu.dimension_semantics<parallel>, #tpu.dimension_semantics<arbitrary>], iteration_bounds = array<i64: 1, 1>, scalar_prefetch = 0 : i64, scratch_operands = 2 : i64, tpu.core_type = #tpu.core_type<tc>, window_params = [{transform_indices = @transform_0, window_bounds = array<i64: 2, 4, 16, 16>}, {transform_indices = @transform_1, window_bounds = array<i64: 2, 16, 12>}]} {
    %c0 = arith.constant 0 : index
    %c0_0 = arith.constant 0 : index
    %c0_1 = arith.constant 0 : index
    %c0_2 = arith.constant 0 : index
    %0 = vector.load %arg2[%c0, %c0_0, %c0_1, %c0_2] : memref<2x4x16x16xf32, #tpu.memory_space<vmem>>, vector<2x4x16x16xf32>
    %1 = vector.extract_strided_slice %0 {offsets = [0, 0, 0, 0], sizes = [2, 1, 16, 16], strides = [1, 1, 1, 1]} : vector<2x4x16x16xf32> to vector<2x1x16x16xf32>
    %2 = vector.shape_cast %1 : vector<2x1x16x16xf32> to vector<2x16x16xf32>
    %3 = vector.extract_strided_slice %0 {offsets = [0, 1, 0, 0], sizes = [2, 1, 16, 16], strides = [1, 1, 1, 1]} : vector<2x4x16x16xf32> to vector<2x1x16x16xf32>
    %4 = vector.shape_cast %3 : vector<2x1x16x16xf32> to vector<2x16x16xf32>
    %5 = arith.addf %2, %4 : vector<2x16x16xf32>
    %6 = vector.extract_strided_slice %0 {offsets = [0, 2, 0, 0], sizes = [2, 1, 16, 16], strides = [1, 1, 1, 1]} : vector<2x4x16x16xf32> to vector<2x1x16x16xf32>
    %7 = vector.shape_cast %6 : vector<2x1x16x16xf32> to vector<2x16x16xf32>
    %8 = arith.addf %5, %7 : vector<2x16x16xf32>
    %9 = vector.extract_strided_slice %0 {offsets = [0, 3, 0, 0], sizes = [2, 1, 16, 16], strides = [1, 1, 1, 1]} : vector<2x4x16x16xf32> to vector<2x1x16x16xf32>
    %10 = vector.shape_cast %9 : vector<2x1x16x16xf32> to vector<2x16x16xf32>
    %11 = arith.addf %8, %10 : vector<2x16x16xf32>
    %c0_3 = arith.constant 0 : index
    %c4 = arith.constant 4 : index
    %c0_4 = arith.constant 0 : index
    %12 = vector.load %arg4[%c0_3, %c4, %c0_4] : memref<2x20x16xf32, #tpu.memory_space<vmem>>, vector<2x16x16xf32>
    tpu.vector_store %arg4[%c0_3, %c4, %c0_4], %11 {strides = array<i32>} : memref<2x20x16xf32, #tpu.memory_space<vmem>>, vector<2x16x16xf32>,
    %c0_5 = arith.constant 0 : index
    %c0_6 = arith.constant 0 : index
    %c0_7 = arith.constant 0 : index
    %13 = vector.load %arg4[%c0_5, %c0_6, %c0_7] : memref<2x20x16xf32, #tpu.memory_space<vmem>>, vector<2x16x16xf32>
    %cst = arith.constant 0.120078385 : f32
    %14 = vector.broadcast %cst : f32 to vector<2x16x16xf32>
    %15 = arith.mulf %14, %13 : vector<2x16x16xf32>
    %c0_8 = arith.constant 0 : index
    %c1 = arith.constant 1 : index
    %c0_9 = arith.constant 0 : index
    %16 = vector.load %arg4[%c0_8, %c1, %c0_9] : memref<2x20x16xf32, #tpu.memory_space<vmem>>, vector<2x16x16xf32>
    %cst_10 = arith.constant 0.233880758 : f32
    %17 = vector.broadcast %cst_10 : f32 to vector<2x16x16xf32>
    %18 = arith.mulf %17, %16 : vector<2x16x16xf32>
    %19 = arith.addf %15, %18 : vector<2x16x16xf32>
    %c0_11 = arith.constant 0 : index
    %c2 = arith.constant 2 : index
    %c0_12 = arith.constant 0 : index
    %20 = vector.load %arg4[%c0_11, %c2, %c0_12] : memref<2x20x16xf32, #tpu.memory_space<vmem>>, vector<2x16x16xf32>
    %cst_13 = arith.constant 0.292081714 : f32
    %21 = vector.broadcast %cst_13 : f32 to vector<2x16x16xf32>
    %22 = arith.mulf %21, %20 : vector<2x16x16xf32>
    %23 = arith.addf %19, %22 : vector<2x16x16xf32>
    %c0_14 = arith.constant 0 : index
    %c3 = arith.constant 3 : index
    %c0_15 = arith.constant 0 : index
    %24 = vector.load %arg4[%c0_14, %c3, %c0_15] : memref<2x20x16xf32, #tpu.memory_space<vmem>>, vector<2x16x16xf32>
    %cst_16 = arith.constant 0.233880758 : f32
    %25 = vector.broadcast %cst_16 : f32 to vector<2x16x16xf32>
    %26 = arith.mulf %25, %24 : vector<2x16x16xf32>
    %27 = arith.addf %23, %26 : vector<2x16x16xf32>
    %c0_17 = arith.constant 0 : index
    %c4_18 = arith.constant 4 : index
    %c0_19 = arith.constant 0 : index
    %28 = vector.load %arg4[%c0_17, %c4_18, %c0_19] : memref<2x20x16xf32, #tpu.memory_space<vmem>>, vector<2x16x16xf32>
    %cst_20 = arith.constant 0.120078385 : f32
    %29 = vector.broadcast %cst_20 : f32 to vector<2x16x16xf32>
    %30 = arith.mulf %29, %28 : vector<2x16x16xf32>
    %31 = arith.addf %27, %30 : vector<2x16x16xf32>
    %c0_21 = arith.constant 0 : index
    %c0_22 = arith.constant 0 : index
    %c0_23 = arith.constant 0 : index
    %32 = vector.load %arg5[%c0_21, %c0_22, %c0_23] : memref<2x16x16xf32, #tpu.memory_space<vmem>>, vector<2x16x16xf32>
    tpu.vector_store %arg5[%c0_21, %c0_22, %c0_23], %31 {strides = array<i32>} : memref<2x16x16xf32, #tpu.memory_space<vmem>>, vector<2x16x16xf32>,
    %c0_24 = arith.constant 0 : index
    %c0_25 = arith.constant 0 : index
    %c0_26 = arith.constant 0 : index
    %33 = vector.load %arg5[%c0_24, %c0_25, %c0_26] : memref<2x16x16xf32, #tpu.memory_space<vmem>>, vector<2x16x12xf32>
    %cst_27 = arith.constant 0.120078385 : f32
    %34 = vector.broadcast %cst_27 : f32 to vector<2x16x12xf32>
    %35 = arith.mulf %34, %33 : vector<2x16x12xf32>
    %c0_28 = arith.constant 0 : index
    %c0_29 = arith.constant 0 : index
    %c1_30 = arith.constant 1 : index
    %36 = vector.load %arg5[%c0_28, %c0_29, %c1_30] : memref<2x16x16xf32, #tpu.memory_space<vmem>>, vector<2x16x12xf32>
    %cst_31 = arith.constant 0.233880758 : f32
    %37 = vector.broadcast %cst_31 : f32 to vector<2x16x12xf32>
    %38 = arith.mulf %37, %36 : vector<2x16x12xf32>
    %39 = arith.addf %35, %38 : vector<2x16x12xf32>
    %c0_32 = arith.constant 0 : index
    %c0_33 = arith.constant 0 : index
    %c2_34 = arith.constant 2 : index
    %40 = vector.load %arg5[%c0_32, %c0_33, %c2_34] : memref<2x16x16xf32, #tpu.memory_space<vmem>>, vector<2x16x12xf32>
    %cst_35 = arith.constant 0.292081714 : f32
    %41 = vector.broadcast %cst_35 : f32 to vector<2x16x12xf32>
    %42 = arith.mulf %41, %40 : vector<2x16x12xf32>
    %43 = arith.addf %39, %42 : vector<2x16x12xf32>
    %c0_36 = arith.constant 0 : index
    %c0_37 = arith.constant 0 : index
    %c3_38 = arith.constant 3 : index
    %44 = vector.load %arg5[%c0_36, %c0_37, %c3_38] : memref<2x16x16xf32, #tpu.memory_space<vmem>>, vector<2x16x12xf32>
    %cst_39 = arith.constant 0.233880758 : f32
    %45 = vector.broadcast %cst_39 : f32 to vector<2x16x12xf32>
    %46 = arith.mulf %45, %44 : vector<2x16x12xf32>
    %47 = arith.addf %43, %46 : vector<2x16x12xf32>
    %c0_40 = arith.constant 0 : index
    %c0_41 = arith.constant 0 : index
    %c4_42 = arith.constant 4 : index
    %48 = vector.load %arg5[%c0_40, %c0_41, %c4_42] : memref<2x16x16xf32, #tpu.memory_space<vmem>>, vector<2x16x12xf32>
    %cst_43 = arith.constant 0.120078385 : f32
    %49 = vector.broadcast %cst_43 : f32 to vector<2x16x12xf32>
    %50 = arith.mulf %49, %48 : vector<2x16x12xf32>
    %51 = arith.addf %47, %50 : vector<2x16x12xf32>
    %c0_44 = arith.constant 0 : index
    %c0_45 = arith.constant 0 : index
    %c0_46 = arith.constant 0 : index
    %52 = vector.load %arg3[%c0_44, %c0_45, %c0_46] : memref<2x16x12xf32, #tpu.memory_space<vmem>>, vector<2x16x12xf32>
    tpu.vector_store %arg3[%c0_44, %c0_45, %c0_46], %51 {strides = array<i32>} : memref<2x16x12xf32, #tpu.memory_space<vmem>>, vector<2x16x12xf32>,
    return
  }
  func.func @transform_0(%arg0: i32, %arg1: i32) -> (i32, i32, i32, i32) {
    %c0_i32 = arith.constant 0 : i32
    %c0_i32_0 = arith.constant 0 : i32
    %c0_i32_1 = arith.constant 0 : i32
    return %arg0, %c0_i32, %arg1, %c0_i32_0 : i32, i32, i32, i32
  }
  func.func @transform_1(%arg0: i32, %arg1: i32) -> (i32, i32, i32) {
    %c0_i32 = arith.constant 0 : i32
    %c0_i32_0 = arith.constant 0 : i32
    return %arg0, %arg1, %c0_i32 : i32, i32, i32
  }
}

</mosaic_0001>

<llo_original>
// kernel: tpu_custom_call.1
$region0: #{tpu_custom_call.1}
  #allocation0 [shape = 'u32[]', space=smem, size = 0x4, offset = 0x4, fixed_abs, tag = 'smem constant byte address 0x4 - core index']
  #allocation1 [shape = 'u32[144,128]{1,0:T(1,128)}', space=vmem, size = 0x12000, scoped, tag = 'internal scratch']
  #allocation2 [shape = 'f32[2,20,16]{2,1,0:T(8,128)}', space=vmem, size = 0x6000, scoped, tag = 'scratch operand']
  #allocation3 [shape = 'f32[2,16,16]{2,1,0:T(8,128)}', space=vmem, size = 0x4000, scoped, tag = 'scratch operand']
  %s0 = inlined_call_operand.hbm [shape: f32[2,4,16,16], index: 0, kind: input, shape index: {}]
  %s1 = inlined_call_operand.vmem [shape: f32[2,16,12], index: 1, kind: output, shape index: {}]
  %s2 = sld [smem:[#allocation0]]
  $region18: #{tpu_custom_call.1} parent=0
    _
  %s4 = ssub.s32 1, %s2
  %s5 = scalar_select 0, %s4, %s2
  $region1: #{tpu_custom_call.1} parent=0
    #allocation4 [shape = 'u8[65536]{0}', space=vmem, size = 0x10000, scoped, tag = 'input window, operand 0, single buffered']
    #allocation5 [shape = 's32[1]{0}', space=sflag, size = 0x4, scoped, tag = 'scoped memory for tpu_custom_call.1']
    %6 = vsyncpa [#allocation5], 0
    // Predicated region
    $region2: #{tpu_custom_call.1} parent=1 // pred_check
      _
    $region3: #{tpu_custom_call.1} parent=1 // pred_check_branch
      %8 = sbr.rel (0) target = $region5
    $region4: #{tpu_custom_call.1} parent=1 // pred_region
      %s10 = ssub.s32 2048, 2048
      %11 = vsyncadd [#allocation5], %s10
      %s12 = sshll.u32 [#allocation4], 4
      %s13 = int_to_ptr.vmem [resolvable:$true] %s12
      %18 = dma.hbm_to_vmem [thread:$0]  %s0, 2048, %s13, [#allocation5], 128, 128, 8
    $region5: #{tpu_custom_call.1} parent=1 // pred_fallthru
      _
    // Predicated region
    $region6: #{tpu_custom_call.1} parent=1 // pred_check
      _
    $region7: #{tpu_custom_call.1} parent=1 // pred_check_branch
      %20 = sbr.rel (0) target = $region9
    $region8: #{tpu_custom_call.1} parent=1 // pred_region
      %21 = dma.done [#allocation5], 2048
    $region9: #{tpu_custom_call.1} parent=1 // pred_fallthru
      _
    %v22 = vld [vmem:[#allocation4] sm:$0xff]
    %v23 = vld [vmem:[#allocation4 + $0x8] sm:$0xff]
    %v24 = vld [vmem:[#allocation4 + $0x10] sm:$0xff]
    %v25 = vld [vmem:[#allocation4 + $0x18] sm:$0xff]
    %v26 = vld [vmem:[#allocation4 + $0x20] sm:$0xff]
    %v27 = vld [vmem:[#allocation4 + $0x28] sm:$0xff]
    %v28 = vld [vmem:[#allocation4 + $0x30] sm:$0xff]
    %v29 = vld [vmem:[#allocation4 + $0x38] sm:$0xff]
    %v30 = vld [vmem:[#allocation4 + $0x40] sm:$0xff]
    %v31 = vld [vmem:[#allocation4 + $0x48] sm:$0xff]
    %v32 = vld [vmem:[#allocation4 + $0x50] sm:$0xff]
    %v33 = vld [vmem:[#allocation4 + $0x58] sm:$0xff]
    %v34 = vld [vmem:[#allocation4 + $0x60] sm:$0xff]
    %v35 = vld [vmem:[#allocation4 + $0x68] sm:$0xff]
    %v36 = vld [vmem:[#allocation4 + $0x70] sm:$0xff]
    %v37 = vld [vmem:[#allocation4 + $0x78] sm:$0xff]
    %v38 = vadd.f32 %v22, %v24
    %v39 = vadd.f32 %v23, %v25
    %v40 = vadd.f32 %v30, %v32
    %v41 = vadd.f32 %v31, %v33
    %v42 = vadd.f32 %v38, %v26
    %v43 = vadd.f32 %v39, %v27
    %v44 = vadd.f32 %v40, %v34
    %v45 = vadd.f32 %v41, %v35
    %v46 = vadd.f32 %v42, %v28
    %v47 = vadd.f32 %v43, %v29
    %v48 = vadd.f32 %v44, %v36
    %v49 = vadd.f32 %v45, %v37
    %vm50 = vcmask 130048
    %51 = vst.msk [vmem:[#allocation2 + $0x4] sm:$0xff] %vm50, %v46
    %52 = vst.msk [vmem:[#allocation2 + $0xc] sm:$0xff] %vm50, %v47
    %53 = vst.msk [vmem:[#allocation2 + $0x1c] sm:$0xff] %vm50, %v48
    %54 = vst.msk [vmem:[#allocation2 + $0x24] sm:$0xff] %vm50, %v49
    %v55 = vld [vmem:[#allocation2] sm:$0xff]
    %v56 = vld [vmem:[#allocation2 + $0x8] sm:$0xff]
    %v57 = vld [vmem:[#allocation2 + $0x18] sm:$0xff]
    %v58 = vld [vmem:[#allocation2 + $0x20] sm:$0xff]
    %v59 = vmul.f32 %v55, 0.120078385
    %v60 = vmul.f32 %v56, 0.120078385
    %v61 = vmul.f32 %v57, 0.120078385
    %v62 = vmul.f32 %v58, 0.120078385
    %v63 = vld [vmem:[#allocation2 + $0x1] sm:$0xff]
    %v64 = vld [vmem:[#allocation2 + $0x9] sm:$0xff]
    %v65 = vld [vmem:[#allocation2 + $0x19] sm:$0xff]
    %v66 = vld [vmem:[#allocation2 + $0x21] sm:$0xff]
    %v67 = vmul.f32 %v63, 0.23388076
    %v68 = vmul.f32 %v64, 0.23388076
    %v69 = vmul.f32 %v65, 0.23388076
    %v70 = vmul.f32 %v66, 0.23388076
    %v71 = vadd.f32 %v59, %v67
    %v72 = vadd.f32 %v60, %v68
    %v73 = vadd.f32 %v61, %v69
    %v74 = vadd.f32 %v62, %v70
    %v75 = vld [vmem:[#allocation2 + $0x2] sm:$0xff]
    %v76 = vld [vmem:[#allocation2 + $0xa] sm:$0xff]
    %v77 = vld [vmem:[#allocation2 + $0x1a] sm:$0xff]
    %v78 = vld [vmem:[#allocation2 + $0x22] sm:$0xff]
    %v79 = vmul.f32 %v75, 0.2920817
    %v80 = vmul.f32 %v76, 0.2920817
    %v81 = vmul.f32 %v77, 0.2920817
    %v82 = vmul.f32 %v78, 0.2920817
    %v83 = vadd.f32 %v71, %v79
    %v84 = vadd.f32 %v72, %v80
    %v85 = vadd.f32 %v73, %v81
    %v86 = vadd.f32 %v74, %v82
    %v87 = vld [vmem:[#allocation2 + $0x3] sm:$0xff]
    %v88 = vld [vmem:[#allocation2 + $0xb] sm:$0xff]
    %v89 = vld [vmem:[#allocation2 + $0x1b] sm:$0xff]
    %v90 = vld [vmem:[#allocation2 + $0x23] sm:$0xff]
    %v91 = vmul.f32 %v87, 0.23388076
    %v92 = vmul.f32 %v88, 0.23388076
    %v93 = vmul.f32 %v89, 0.23388076
    %v94 = vmul.f32 %v90, 0.23388076
    %v95 = vadd.f32 %v83, %v91
    %v96 = vadd.f32 %v84, %v92
    %v97 = vadd.f32 %v85, %v93
    %v98 = vadd.f32 %v86, %v94
    %v99 = vld [vmem:[#allocation2 + $0x4] sm:$0xff]
    %v100 = vld [vmem:[#allocation2 + $0xc] sm:$0xff]
    %v101 = vld [vmem:[#allocation2 + $0x1c] sm:$0xff]
    %v102 = vld [vmem:[#allocation2 + $0x24] sm:$0xff]
    %v103 = vmul.f32 %v99, 0.120078385
    %v104 = vmul.f32 %v100, 0.120078385
    %v105 = vmul.f32 %v101, 0.120078385
    %v106 = vmul.f32 %v102, 0.120078385
    %v107 = vadd.f32 %v95, %v103
    %v108 = vadd.f32 %v96, %v104
    %v109 = vadd.f32 %v97, %v105
    %v110 = vadd.f32 %v98, %v106
    %111 = vst.msk [vmem:[#allocation3] sm:$0xff] %vm50, %v107
    %112 = vst.msk [vmem:[#allocation3 + $0x8] sm:$0xff] %vm50, %v108
    %113 = vst.msk [vmem:[#allocation3 + $0x10] sm:$0xff] %vm50, %v109
    %114 = vst.msk [vmem:[#allocation3 + $0x18] sm:$0xff] %vm50, %v110
    %v115 = vld [vmem:[#allocation3] sm:$0xff]
    %v116 = vld [vmem:[#allocation3 + $0x8] sm:$0xff]
    %v117 = vld [vmem:[#allocation3 + $0x10] sm:$0xff]
    %v118 = vld [vmem:[#allocation3 + $0x18] sm:$0xff]
    %v119 = vmul.f32 %v115, 0.120078385
    %v120 = vmul.f32 %v116, 0.120078385
    %v121 = vmul.f32 %v117, 0.120078385
    %v122 = vmul.f32 %v118, 0.120078385
    %v123 = vmul.f32 %v115, 0.23388076
    %v124 = vmul.f32 %v116, 0.23388076
    %v125 = vmul.f32 %v117, 0.23388076
    %v126 = vmul.f32 %v118, 0.23388076
    %131 = vrot.lane.b32.xlu0 %v123, 127
    %v132 = vpop.permute.xlu0 %131
    %133 = vrot.lane.b32.xlu0 %v124, 127
    %v134 = vpop.permute.xlu0 %133
    %135 = vrot.lane.b32.xlu0 %v125, 127
    %v136 = vpop.permute.xlu0 %135
    %137 = vrot.lane.b32.xlu0 %v126, 127
    %v138 = vpop.permute.xlu0 %137
    %v143 = vadd.f32 %v119, %v132
    %v144 = vadd.f32 %v120, %v134
    %v145 = vadd.f32 %v121, %v136
    %v146 = vadd.f32 %v122, %v138
    %v147 = vmul.f32 %v115, 0.2920817
    %v148 = vmul.f32 %v116, 0.2920817
    %v149 = vmul.f32 %v117, 0.2920817
    %v150 = vmul.f32 %v118, 0.2920817
    %155 = vrot.lane.b32.xlu0 %v147, 126
    %v156 = vpop.permute.xlu0 %155
    %157 = vrot.lane.b32.xlu0 %v148, 126
    %v158 = vpop.permute.xlu0 %157
    %159 = vrot.lane.b32.xlu0 %v149, 126
    %v160 = vpop.permute.xlu0 %159
    %161 = vrot.lane.b32.xlu0 %v150, 126
    %v162 = vpop.permute.xlu0 %161
    %v167 = vadd.f32 %v143, %v156
    %v168 = vadd.f32 %v144, %v158
    %v169 = vadd.f32 %v145, %v160
    %v170 = vadd.f32 %v146, %v162
    %171 = vrot.lane.b32.xlu0 %v123, 125
    %v172 = vpop.permute.xlu0 %171
    %173 = vrot.lane.b32.xlu0 %v124, 125
    %v174 = vpop.permute.xlu0 %173
    %175 = vrot.lane.b32.xlu0 %v125, 125
    %v176 = vpop.permute.xlu0 %175
    %177 = vrot.lane.b32.xlu0 %v126, 125
    %v178 = vpop.permute.xlu0 %177
    %v183 = vadd.f32 %v167, %v172
    %v184 = vadd.f32 %v168, %v174
    %v185 = vadd.f32 %v169, %v176
    %v186 = vadd.f32 %v170, %v178
    %191 = vrot.lane.b32.xlu0 %v119, 124
    %v192 = vpop.permute.xlu0 %191
    %193 = vrot.lane.b32.xlu0 %v120, 124
    %v194 = vpop.permute.xlu0 %193
    %195 = vrot.lane.b32.xlu0 %v121, 124
    %v196 = vpop.permute.xlu0 %195
    %197 = vrot.lane.b32.xlu0 %v122, 124
    %v198 = vpop.permute.xlu0 %197
    %v203 = vadd.f32 %v183, %v192
    %v204 = vadd.f32 %v184, %v194
    %v205 = vadd.f32 %v185, %v196
    %v206 = vadd.f32 %v186, %v198
    %vm207 = vcmask 97280
    %208 = vst.msk [vmem:[%s1] sm:$0xff] %vm207, %v203
    %209 = vst.msk [vmem:[%s1 + $0x8] sm:$0xff] %vm207, %v204
    %210 = vst.msk [vmem:[%s1 + $0x10] sm:$0xff] %vm207, %v205
    %211 = vst.msk [vmem:[%s1 + $0x18] sm:$0xff] %vm207, %v206
    // Predicated region
    $region10: #{tpu_custom_call.1} parent=1 // pred_check
      _
    $region11: #{tpu_custom_call.1} parent=1 // pred_check_branch
      %213 = sbr.rel (0) target = $region13
    $region12: #{tpu_custom_call.1} parent=1 // pred_region
      _
    $region13: #{tpu_custom_call.1} parent=1 // pred_fallthru
      _
    // Predicated region
    $region14: #{tpu_custom_call.1} parent=1 // pred_check
      _
    $region15: #{tpu_custom_call.1} parent=1 // pred_check_branch
      %215 = sbr.rel (0) target = $region17
    $region16: #{tpu_custom_call.1} parent=1 // pred_region
      _
    $region17: #{tpu_custom_call.1} parent=1 // pred_fallthru
      _
    %216 = vsyncpa [#allocation5], 1

</llo_original>
